<compile_context>
chip_gen: v5e
topology: v5e:2x2
jax: 0.10.0
libtpu: 0.0.40
codegen_flags: <defaults>
</compile_context>

<pallas_src>
import jax
import jax.numpy as jnp
from jax.experimental import pallas as pl
from jax.experimental.pallas import tpu as pltpu

W1 = 512  # hidden width (matches `w1 = 512` in the PyTorch module)


def _round_up(x, m):
    return ((x + m - 1) // m) * m


def _mlp_kernel(x_ref,
                w1_ref, b1_ref,
                w2_ref, b2_ref,
                w3_ref, b3_ref,
                w4_ref, b4_ref,
                o_ref):
    """Fused 4-layer MLP forward for one batch tile, entirely in VMEM."""
    x = x_ref[...]

    h = jnp.dot(x, w1_ref[...], preferred_element_type=jnp.float32) + b1_ref[...]
    h = jnp.maximum(h, 0.0)

    h = jnp.dot(h, w2_ref[...], preferred_element_type=jnp.float32) + b2_ref[...]
    h = jnp.maximum(h, 0.0)

    h = jnp.dot(h, w3_ref[...], preferred_element_type=jnp.float32) + b3_ref[...]
    h = jnp.maximum(h, 0.0)

    h = jnp.dot(h, w4_ref[...], preferred_element_type=jnp.float32) + b4_ref[...]

    o_ref[...] = h.astype(o_ref.dtype)


def neural_network1_forward(x, params, *, batch_tile=None):
    """Pallas forward pass. x: (B, input_dim) float32. Returns (y, zeros(1))."""
    (w1, b1), (w2, b2), (w3, b3), (w4, b4) = params
    B, D = x.shape
    hid = w1.shape[1]
    bot = w2.shape[1]

    # --- lane padding (exact: zeros through ReLU stay zero, zero weight
    # rows/cols add nothing) ---
    Dp = _round_up(D, 128)
    botp = _round_up(bot, 128)

    # --- batch tile choice: fill the MXU M-dim, amortize grid-step overhead,
    # keep >=2 grid steps for large batches (v7x dual TensorCore) ---
    if batch_tile is None:
        batch_tile = 256 if B > 256 else _round_up(max(B, 8), 8)
    Bp = _round_up(B, batch_tile)

    f32 = jnp.float32
    xp = jnp.zeros((Bp, Dp), f32).at[:B, :D].set(x.astype(f32))
    w1p = jnp.zeros((Dp, hid), f32).at[:D, :].set(w1.astype(f32))
    b1p = b1.reshape(1, hid).astype(f32)
    w2p = jnp.zeros((hid, botp), f32).at[:, :bot].set(w2.astype(f32))
    b2p = jnp.zeros((1, botp), f32).at[:, :bot].set(b2.reshape(1, bot).astype(f32))
    w3p = jnp.zeros((botp, hid), f32).at[:bot, :].set(w3.astype(f32))
    b3p = b3.reshape(1, hid).astype(f32)
    w4p = jnp.zeros((hid, Dp), f32).at[:, :D].set(w4.astype(f32))
    b4p = jnp.zeros((1, Dp), f32).at[:, :D].set(b4.reshape(1, D).astype(f32))

    # Weights / biases are small; load them whole into VMEM for every batch
    # tile (block == full array, constant index map). Grid iterates over batch
    # tiles only.
    def full(shape):
        return pl.BlockSpec(shape, lambda i: tuple(0 for _ in shape))

    flops = 2 * Bp * (Dp * hid + hid * botp + botp * hid + hid * Dp)
    bytes_accessed = 4 * (2 * Bp * Dp                      # x in, y out
                          + 2 * (Dp * hid + hid * botp)    # all four weights
                          + (2 * hid + botp + Dp))         # biases

    y = pl.pallas_call(
        _mlp_kernel,
        out_shape=jax.ShapeDtypeStruct((Bp, Dp), f32),
        grid_spec=pl.GridSpec(
            grid=(Bp // batch_tile,),
            in_specs=[
                pl.BlockSpec((batch_tile, Dp), lambda i: (i, 0)),  # x tile
                full((Dp, hid)), full((1, hid)),       # layer 1
                full((hid, botp)), full((1, botp)),    # layer 2
                full((botp, hid)), full((1, hid)),     # layer 3
                full((hid, Dp)), full((1, Dp)),        # layer 4
            ],
            out_specs=pl.BlockSpec((batch_tile, Dp), lambda i: (i, 0)),
        ),
        compiler_params=pltpu.CompilerParams(
            dimension_semantics=("parallel",)),
        cost_estimate=pl.CostEstimate(
            flops=flops, transcendentals=0, bytes_accessed=bytes_accessed),
    )(xp, w1p, b1p, w2p, b2p, w3p, b3p, w4p, b4p)

    # Strip the padding back off.
    y = y[:B, :D].astype(x.dtype)

    # Second output of the PyTorch forward is a constant zeros(1) tensor;
    # no kernel needed for it.
    return y, jnp.zeros((1,), dtype=x.dtype)


def init_params(key, input_dim, bottle_dim):
    """Deterministic init mimicking nn.Linear default (uniform ±1/sqrt(fan_in)).
    Weights stored as (in, out) = transposed PyTorch layout."""
    dims = [(input_dim, W1), (W1, bottle_dim), (bottle_dim, W1), (W1, input_dim)]
    params = []
    for (fan_in, fan_out) in dims:
        key, kw, kb = jax.random.split(key, 3)
        bound = 1.0 / jnp.sqrt(float(fan_in))
        w = jax.random.uniform(kw, (fan_in, fan_out), jnp.float32, -bound, bound)
        b = jax.random.uniform(kb, (1, fan_out), jnp.float32, -bound, bound)
        params.append((w, b))
    return params


def _reference_forward(x, params):
    """Plain-JAX reference for correctness checking."""
    (w1, b1), (w2, b2), (w3, b3), (w4, b4) = params
    h = jnp.maximum(x @ w1 + b1, 0.0)
    h = jnp.maximum(h @ w2 + b2, 0.0)
    h = jnp.maximum(h @ w3 + b3, 0.0)
    return h @ w4 + b4


if __name__ == "__main__":
    key = jax.random.PRNGKey(0)
    input_dim = 64
    bottle_dim = 32
    batch = 16

    kx, kp = jax.random.split(key)
    x = jax.random.normal(kx, (batch, input_dim), dtype=jnp.float32)
    params = init_params(kp, input_dim, bottle_dim)

    y, z = neural_network1_forward(x, params)
    y = jax.block_until_ready(y)
    z = jax.block_until_ready(z)

    y_ref = _reference_forward(x, params)
    assert y.shape == (batch, input_dim)
    assert z.shape == (1,)
    assert jnp.allclose(y, y_ref, atol=1e-4, rtol=1e-4), "mismatch vs reference"

    print("KERNEL_OK")
</pallas_src>

<mosaic_0001>
module attributes {stable_mosaic.version = 11 : i64} {
  func.func @_mlp_kernel(%arg0: i32, %arg1: memref<16x128xf32, #tpu.memory_space<vmem>>, %arg2: memref<128x512xf32, #tpu.memory_space<vmem>>, %arg3: memref<1x512xf32, #tpu.memory_space<vmem>>, %arg4: memref<512x128xf32, #tpu.memory_space<vmem>>, %arg5: memref<1x128xf32, #tpu.memory_space<vmem>>, %arg6: memref<128x512xf32, #tpu.memory_space<vmem>>, %arg7: memref<1x512xf32, #tpu.memory_space<vmem>>, %arg8: memref<512x128xf32, #tpu.memory_space<vmem>>, %arg9: memref<1x128xf32, #tpu.memory_space<vmem>>, %arg10: memref<16x128xf32, #tpu.memory_space<vmem>>) attributes {dimension_semantics = [#tpu.dimension_semantics<parallel>], iteration_bounds = array<i64: 1>, scalar_prefetch = 0 : i64, scratch_operands = 0 : i64, tpu.core_type = #tpu.core_type<tc>, window_params = [{transform_indices = @transform_0, window_bounds = array<i64: 16, 128>}, {pipeline_mode = #tpu.pipeline_mode<synchronous>, transform_indices = @transform_1, window_bounds = array<i64: 128, 512>}, {pipeline_mode = #tpu.pipeline_mode<synchronous>, transform_indices = @transform_2, window_bounds = array<i64: 1, 512>}, {pipeline_mode = #tpu.pipeline_mode<synchronous>, transform_indices = @transform_3, window_bounds = array<i64: 512, 128>}, {pipeline_mode = #tpu.pipeline_mode<synchronous>, transform_indices = @transform_4, window_bounds = array<i64: 1, 128>}, {pipeline_mode = #tpu.pipeline_mode<synchronous>, transform_indices = @transform_5, window_bounds = array<i64: 128, 512>}, {pipeline_mode = #tpu.pipeline_mode<synchronous>, transform_indices = @transform_6, window_bounds = array<i64: 1, 512>}, {pipeline_mode = #tpu.pipeline_mode<synchronous>, transform_indices = @transform_7, window_bounds = array<i64: 512, 128>}, {pipeline_mode = #tpu.pipeline_mode<synchronous>, transform_indices = @transform_8, window_bounds = array<i64: 1, 128>}, {transform_indices = @transform_9, window_bounds = array<i64: 16, 128>}]} {
    %c0 = arith.constant 0 : index
    %c0_0 = arith.constant 0 : index
    %0 = vector.load %arg1[%c0, %c0_0] : memref<16x128xf32, #tpu.memory_space<vmem>>, vector<16x128xf32>
    %c0_1 = arith.constant 0 : index
    %c0_2 = arith.constant 0 : index
    %1 = vector.load %arg2[%c0_1, %c0_2] : memref<128x512xf32, #tpu.memory_space<vmem>>, vector<128x512xf32>
    %cst = arith.constant dense<0.000000e+00> : vector<16x512xf32>
    %2 = tpu.matmul %0, %1, %cst {dimension_numbers = #tpu.dot_dimension_numbers<[1], [0], [0], [1], [0, 0, 1, 1], [], []>} : vector<16x128xf32>, vector<128x512xf32>, vector<16x512xf32> -> vector<16x512xf32>
    %c0_3 = arith.constant 0 : index
    %c0_4 = arith.constant 0 : index
    %3 = vector.load %arg3[%c0_3, %c0_4] : memref<1x512xf32, #tpu.memory_space<vmem>>, vector<1x512xf32>
    %4 = vector.broadcast %3 : vector<1x512xf32> to vector<16x512xf32>
    %5 = arith.addf %2, %4 : vector<16x512xf32>
    %cst_5 = arith.constant 0.000000e+00 : f32
    %6 = vector.broadcast %cst_5 : f32 to vector<16x512xf32>
    %7 = arith.maximumf %5, %6 : vector<16x512xf32>
    %c0_6 = arith.constant 0 : index
    %c0_7 = arith.constant 0 : index
    %8 = vector.load %arg4[%c0_6, %c0_7] : memref<512x128xf32, #tpu.memory_space<vmem>>, vector<512x128xf32>
    %cst_8 = arith.constant dense<0.000000e+00> : vector<16x128xf32>
    %9 = tpu.matmul %7, %8, %cst_8 {dimension_numbers = #tpu.dot_dimension_numbers<[1], [0], [0], [1], [0, 0, 1, 1], [], []>} : vector<16x512xf32>, vector<512x128xf32>, vector<16x128xf32> -> vector<16x128xf32>
    %c0_9 = arith.constant 0 : index
    %c0_10 = arith.constant 0 : index
    %10 = vector.load %arg5[%c0_9, %c0_10] : memref<1x128xf32, #tpu.memory_space<vmem>>, vector<1x128xf32>
    %11 = vector.broadcast %10 : vector<1x128xf32> to vector<16x128xf32>
    %12 = arith.addf %9, %11 : vector<16x128xf32>
    %cst_11 = arith.constant 0.000000e+00 : f32
    %13 = vector.broadcast %cst_11 : f32 to vector<16x128xf32>
    %14 = arith.maximumf %12, %13 : vector<16x128xf32>
    %c0_12 = arith.constant 0 : index
    %c0_13 = arith.constant 0 : index
    %15 = vector.load %arg6[%c0_12, %c0_13] : memref<128x512xf32, #tpu.memory_space<vmem>>, vector<128x512xf32>
    %cst_14 = arith.constant dense<0.000000e+00> : vector<16x512xf32>
    %16 = tpu.matmul %14, %15, %cst_14 {dimension_numbers = #tpu.dot_dimension_numbers<[1], [0], [0], [1], [0, 0, 1, 1], [], []>} : vector<16x128xf32>, vector<128x512xf32>, vector<16x512xf32> -> vector<16x512xf32>
    %c0_15 = arith.constant 0 : index
    %c0_16 = arith.constant 0 : index
    %17 = vector.load %arg7[%c0_15, %c0_16] : memref<1x512xf32, #tpu.memory_space<vmem>>, vector<1x512xf32>
    %18 = vector.broadcast %17 : vector<1x512xf32> to vector<16x512xf32>
    %19 = arith.addf %16, %18 : vector<16x512xf32>
    %cst_17 = arith.constant 0.000000e+00 : f32
    %20 = vector.broadcast %cst_17 : f32 to vector<16x512xf32>
    %21 = arith.maximumf %19, %20 : vector<16x512xf32>
    %c0_18 = arith.constant 0 : index
    %c0_19 = arith.constant 0 : index
    %22 = vector.load %arg8[%c0_18, %c0_19] : memref<512x128xf32, #tpu.memory_space<vmem>>, vector<512x128xf32>
    %cst_20 = arith.constant dense<0.000000e+00> : vector<16x128xf32>
    %23 = tpu.matmul %21, %22, %cst_20 {dimension_numbers = #tpu.dot_dimension_numbers<[1], [0], [0], [1], [0, 0, 1, 1], [], []>} : vector<16x512xf32>, vector<512x128xf32>, vector<16x128xf32> -> vector<16x128xf32>
    %c0_21 = arith.constant 0 : index
    %c0_22 = arith.constant 0 : index
    %24 = vector.load %arg9[%c0_21, %c0_22] : memref<1x128xf32, #tpu.memory_space<vmem>>, vector<1x128xf32>
    %25 = vector.broadcast %24 : vector<1x128xf32> to vector<16x128xf32>
    %26 = arith.addf %23, %25 : vector<16x128xf32>
    %c0_23 = arith.constant 0 : index
    %c0_24 = arith.constant 0 : index
    %27 = vector.load %arg10[%c0_23, %c0_24] : memref<16x128xf32, #tpu.memory_space<vmem>>, vector<16x128xf32>
    tpu.vector_store %arg10[%c0_23, %c0_24], %26 {strides = array<i32>} : memref<16x128xf32, #tpu.memory_space<vmem>>, vector<16x128xf32>,
    return
  }
  func.func @transform_0(%arg0: i32) -> (i32, i32) {
    %c0_i32 = arith.constant 0 : i32
    %c0_i32_0 = arith.constant 0 : i32
    return %arg0, %c0_i32 : i32, i32
  }
  func.func @transform_1(%arg0: i32) -> (i32, i32) {
    %c0_i32 = arith.constant 0 : i32
    %c0_i32_0 = arith.constant 0 : i32
    %c0_i32_1 = arith.constant 0 : i32
    return %c0_i32, %c0_i32_0 : i32, i32
  }
  func.func @transform_2(%arg0: i32) -> (i32, i32) {
    %c0_i32 = arith.constant 0 : i32
    %c0_i32_0 = arith.constant 0 : i32
    %c0_i32_1 = arith.constant 0 : i32
    return %c0_i32, %c0_i32_0 : i32, i32
  }
  func.func @transform_3(%arg0: i32) -> (i32, i32) {
    %c0_i32 = arith.constant 0 : i32
    %c0_i32_0 = arith.constant 0 : i32
    %c0_i32_1 = arith.constant 0 : i32
    return %c0_i32, %c0_i32_0 : i32, i32
  }
  func.func @transform_4(%arg0: i32) -> (i32, i32) {
    %c0_i32 = arith.constant 0 : i32
    %c0_i32_0 = arith.constant 0 : i32
    %c0_i32_1 = arith.constant 0 : i32
    return %c0_i32, %c0_i32_0 : i32, i32
  }
  func.func @transform_5(%arg0: i32) -> (i32, i32) {
    %c0_i32 = arith.constant 0 : i32
    %c0_i32_0 = arith.constant 0 : i32
    %c0_i32_1 = arith.constant 0 : i32
    return %c0_i32, %c0_i32_0 : i32, i32
  }
  func.func @transform_6(%arg0: i32) -> (i32, i32) {
    %c0_i32 = arith.constant 0 : i32
    %c0_i32_0 = arith.constant 0 : i32
    %c0_i32_1 = arith.constant 0 : i32
    return %c0_i32, %c0_i32_0 : i32, i32
  }
  func.func @transform_7(%arg0: i32) -> (i32, i32) {
    %c0_i32 = arith.constant 0 : i32
    %c0_i32_0 = arith.constant 0 : i32
    %c0_i32_1 = arith.constant 0 : i32
    return %c0_i32, %c0_i32_0 : i32, i32
  }
  func.func @transform_8(%arg0: i32) -> (i32, i32) {
    %c0_i32 = arith.constant 0 : i32
    %c0_i32_0 = arith.constant 0 : i32
    %c0_i32_1 = arith.constant 0 : i32
    return %c0_i32, %c0_i32_0 : i32, i32
  }
  func.func @transform_9(%arg0: i32) -> (i32, i32) {
    %c0_i32 = arith.constant 0 : i32
    %c0_i32_0 = arith.constant 0 : i32
    return %arg0, %c0_i32 : i32, i32
  }
}

</mosaic_0001>

<llo_original>
// kernel: tpu_custom_call.1
$region0: #{tpu_custom_call.1}
  #allocation0 [shape = 'u32[]', space=smem, size = 0x4, offset = 0x4, fixed_abs, tag = 'smem constant byte address 0x4 - core index']
  #allocation1 [shape = 'u32[72,128]{1,0:T(1,128)}', space=vmem, size = 0x9000, scoped, tag = 'internal scratch']
  %s0 = inlined_call_operand.hbm [shape: f32[16,128], index: 0, kind: input, shape index: {}]
  %s1 = inlined_call_operand.hbm [shape: f32[128,512], index: 1, kind: input, shape index: {}]
  %s2 = inlined_call_operand.hbm [shape: f32[1,512], index: 2, kind: input, shape index: {}]
  %s3 = inlined_call_operand.hbm [shape: f32[512,128], index: 3, kind: input, shape index: {}]
  %s4 = inlined_call_operand.vmem [shape: f32[1,128], index: 4, kind: input, shape index: {}]
  %s5 = inlined_call_operand.hbm [shape: f32[128,512], index: 5, kind: input, shape index: {}]
  %s6 = inlined_call_operand.vmem [shape: f32[1,512], index: 6, kind: input, shape index: {}]
  %s7 = inlined_call_operand.hbm [shape: f32[512,128], index: 7, kind: input, shape index: {}]
  %s8 = inlined_call_operand.vmem [shape: f32[1,128], index: 8, kind: input, shape index: {}]
  %s9 = inlined_call_operand.hbm [shape: f32[16,128], index: 9, kind: output, shape index: {}]
  %s10 = sld [smem:[#allocation0]]
  $region70: #{tpu_custom_call.1} parent=0
    _
  %s12 = ssub.s32 1, %s10
  %s13 = scalar_select 0, %s12, %s10
  $region1: #{tpu_custom_call.1} parent=0
    #allocation2 [shape = 'u8[8192]{0}', space=vmem, size = 0x2000, scoped, tag = 'input window, operand 0, single buffered']
    #allocation3 [shape = 's32[1]{0}', space=sflag, size = 0x4, scoped, tag = 'scoped memory for tpu_custom_call.1']
    #allocation4 [shape = 's32[1]{0}', space=sflag, size = 0x4, scoped, tag = 'scoped memory for tpu_custom_call.1']
    #allocation5 [shape = 'u8[262144]{0}', space=vmem, size = 0x40000, scoped, tag = 'input window, operand 1, single buffered']
    #allocation6 [shape = 's32[1]{0}', space=sflag, size = 0x4, scoped, tag = 'scoped memory for tpu_custom_call.1']
    #allocation7 [shape = 'u8[2048]{0}', space=vmem, size = 0x800, scoped, tag = 'input window, operand 2, single buffered']
    #allocation8 [shape = 'u8[262144]{0}', space=vmem, size = 0x40000, scoped, tag = 'input window, operand 3, single buffered']
    #allocation9 [shape = 's32[1]{0}', space=sflag, size = 0x4, scoped, tag = 'scoped memory for tpu_custom_call.1']
    #allocation10 [shape = 'u8[262144]{0}', space=vmem, size = 0x40000, scoped, tag = 'input window, operand 5, single buffered']
    #allocation11 [shape = 'u8[262144]{0}', space=vmem, size = 0x40000, scoped, tag = 'input window, operand 7, single buffered']
    #allocation12 [shape = 's32[1]{0}', space=sflag, size = 0x4, scoped, tag = 'scoped memory for tpu_custom_call.1']
    #allocation13 [shape = 'u8[8192]{0}', space=vmem, size = 0x2000, scoped, tag = 'output window, operand 0, single buffered']
    %14 = vsyncpa [#allocation3], 0
    %15 = vsyncpa [#allocation6], 0
    %16 = vsyncpa [#allocation9], 0
    %17 = vsyncpa [#allocation12], 0
    %18 = vsyncpa [#allocation4], 0
    // Predicated region
    $region2: #{tpu_custom_call.1} parent=1 // pred_check
      _
    $region3: #{tpu_custom_call.1} parent=1 // pred_check_branch
      %20 = sbr.rel (0) target = $region5
    $region4: #{tpu_custom_call.1} parent=1 // pred_region
      %22 = vsyncadd [#allocation3], 0
      %s23 = sshll.u32 %s0, 4
      %s24 = int_to_ptr.hbm [resolvable:$true] %s23
      %s25 = sshll.u32 [#allocation2], 4
      %s26 = int_to_ptr.vmem [resolvable:$true] %s25
      %31 = dma.hbm_to_vmem [thread:$0]  %s24, 256, %s26, [#allocation3], 128, 128, 8
    $region5: #{tpu_custom_call.1} parent=1 // pred_fallthru
      _
    // Predicated region
    $region6: #{tpu_custom_call.1} parent=1 // pred_check
      _
    $region7: #{tpu_custom_call.1} parent=1 // pred_check_branch
      %33 = sbr.rel (0) target = $region9
    $region8: #{tpu_custom_call.1} parent=1 // pred_region
      %35 = vsyncadd [#allocation6], 0
      %s36 = sshll.u32 %s1, 4
      %s37 = int_to_ptr.hbm [resolvable:$true] %s36
      %s38 = sshll.u32 [#allocation5], 4
      %s39 = int_to_ptr.vmem [resolvable:$true] %s38
      %44 = dma.hbm_to_vmem [thread:$0]  %s37, 8192, %s39, [#allocation6], 512, 512, 32
    $region9: #{tpu_custom_call.1} parent=1 // pred_fallthru
      _
    // Predicated region
    $region10: #{tpu_custom_call.1} parent=1 // pred_check
      _
    $region11: #{tpu_custom_call.1} parent=1 // pred_check_branch
      %46 = sbr.rel (0) target = $region13
    $region12: #{tpu_custom_call.1} parent=1 // pred_region
      %48 = vsyncadd [#allocation6], 0
      %s50 = sshll.u32 %s2, 4
      %s51 = int_to_ptr.hbm [resolvable:$true] %s50
      %s52 = sshll.u32 [#allocation7], 4
      %s53 = int_to_ptr.vmem [resolvable:$true] %s52
      %55 = dma.hbm_to_vmem [thread:$0]  %s51, 64, %s53, [#allocation6]
    $region13: #{tpu_custom_call.1} parent=1 // pred_fallthru
      _
    // Predicated region
    $region14: #{tpu_custom_call.1} parent=1 // pred_check
      _
    $region15: #{tpu_custom_call.1} parent=1 // pred_check_branch
      %57 = sbr.rel (0) target = $region17
    $region16: #{tpu_custom_call.1} parent=1 // pred_region
      %59 = vsyncadd [#allocation9], 0
      %s60 = sshll.u32 %s3, 4
      %s61 = int_to_ptr.hbm [resolvable:$true] %s60
      %s62 = sshll.u32 [#allocation8], 4
      %s63 = int_to_ptr.vmem [resolvable:$true] %s62
      %68 = dma.hbm_to_vmem [thread:$0]  %s61, 8192, %s63, [#allocation9], 128, 128, 8
    $region17: #{tpu_custom_call.1} parent=1 // pred_fallthru
      _
    // Predicated region
    $region18: #{tpu_custom_call.1} parent=1 // pred_check
      _
    $region19: #{tpu_custom_call.1} parent=1 // pred_check_branch
      %70 = sbr.rel (0) target = $region21
    $region20: #{tpu_custom_call.1} parent=1 // pred_region
      _
    $region21: #{tpu_custom_call.1} parent=1 // pred_fallthru
      _
    // Predicated region
    $region22: #{tpu_custom_call.1} parent=1 // pred_check
      _
    $region23: #{tpu_custom_call.1} parent=1 // pred_check_branch
      %72 = sbr.rel (0) target = $region25
    $region24: #{tpu_custom_call.1} parent=1 // pred_region
      %74 = vsyncadd [#allocation9], 0
      %s75 = sshll.u32 %s5, 4
      %s76 = int_to_ptr.hbm [resolvable:$true] %s75
      %s77 = sshll.u32 [#allocation10], 4
      %s78 = int_to_ptr.vmem [resolvable:$true] %s77
      %83 = dma.hbm_to_vmem [thread:$0]  %s76, 8192, %s78, [#allocation9], 512, 512, 32
    $region25: #{tpu_custom_call.1} parent=1 // pred_fallthru
      _
    // Predicated region
    $region26: #{tpu_custom_call.1} parent=1 // pred_check
      _
    $region27: #{tpu_custom_call.1} parent=1 // pred_check_branch
      %85 = sbr.rel (0) target = $region29
    $region28: #{tpu_custom_call.1} parent=1 // pred_region
      _
    $region29: #{tpu_custom_call.1} parent=1 // pred_fallthru
      _
    // Predicated region
    $region30: #{tpu_custom_call.1} parent=1 // pred_check
      _
    $region31: #{tpu_custom_call.1} parent=1 // pred_check_branch
      %87 = sbr.rel (0) target = $region33
    $region32: #{tpu_custom_call.1} parent=1 // pred_region
      %89 = vsyncadd [#allocation12], 0
      %s90 = sshll.u32 %s7, 4
      %s91 = int_to_ptr.hbm [resolvable:$true] %s90
      %s92 = sshll.u32 [#allocation11], 4
      %s93 = int_to_ptr.vmem [resolvable:$true] %s92
      %98 = dma.hbm_to_vmem [thread:$0]  %s91, 8192, %s93, [#allocation12], 128, 128, 8
    $region33: #{tpu_custom_call.1} parent=1 // pred_fallthru
      _
    // Predicated region
    $region34: #{tpu_custom_call.1} parent=1 // pred_check
      _
    $region35: #{tpu_custom_call.1} parent=1 // pred_check_branch
      %100 = sbr.rel (0) target = $region37
    $region36: #{tpu_custom_call.1} parent=1 // pred_region
      _
    $region37: #{tpu_custom_call.1} parent=1 // pred_fallthru
      _
    // Predicated region
    $region38: #{tpu_custom_call.1} parent=1 // pred_check
      _
    $region39: #{tpu_custom_call.1} parent=1 // pred_check_branch
      %102 = sbr.rel (0) target = $region41
    $region40: #{tpu_custom_call.1} parent=1 // pred_region
      %104 = dma.done [#allocation3], 256
    $region41: #{tpu_custom_call.1} parent=1 // pred_fallthru
      _
    // Predicated region
    $region42: #{tpu_custom_call.1} parent=1 // pred_check
      _
    $region43: #{tpu_custom_call.1} parent=1 // pred_check_branch
      %106 = sbr.rel (0) target = $region45
    $region44: #{tpu_custom_call.1} parent=1 // pred_region
      %108 = dma.done [#allocation6], 8192
    $region45: #{tpu_custom_call.1} parent=1 // pred_fallthru
      _
    // Predicated region
    $region46: #{tpu_custom_call.1} parent=1 // pred_check
      _
    $region47: #{tpu_custom_call.1} parent=1 // pred_check_branch
      %110 = sbr.rel (0) target = $region49
    $region48: #{tpu_custom_call.1} parent=1 // pred_region
      %112 = dma.done [#allocation6], 64
    $region49: #{tpu_custom_call.1} parent=1 // pred_fallthru
      _
    // Predicated region
    $region50: #{tpu_custom_call.1} parent=1 // pred_check
      _
    $region51: #{tpu_custom_call.1} parent=1 // pred_check_branch
      %114 = sbr.rel (0) target = $region53
    $region52: #{tpu_custom_call.1} parent=1 // pred_region
      %116 = dma.done [#allocation9], 8192
    $region53: #{tpu_custom_call.1} parent=1 // pred_fallthru
      _
    // Predicated region
    $region54: #{tpu_custom_call.1} parent=1 // pred_check
      _
    $region55: #{tpu_custom_call.1} parent=1 // pred_check_branch
      %118 = sbr.rel (0) target = $region57
    $region56: #{tpu_custom_call.1} parent=1 // pred_region
      %120 = dma.done [#allocation9], 8192
    $region57: #{tpu_custom_call.1} parent=1 // pred_fallthru
      _
    // Predicated region
    $region58: #{tpu_custom_call.1} parent=1 // pred_check
      _
    $region59: #{tpu_custom_call.1} parent=1 // pred_check_branch
      %122 = sbr.rel (0) target = $region61
    $region60: #{tpu_custom_call.1} parent=1 // pred_region
      %124 = dma.done [#allocation12], 8192
    $region61: #{tpu_custom_call.1} parent=1 // pred_fallthru
      _
    %v125 = vld [vmem:[#allocation2] sm:$0xff]
    %v126 = vld [vmem:[#allocation2 + $0x8] sm:$0xff]
    %v127 = vld [vmem:[#allocation5] sm:$0xff]
    %v128 = vld [vmem:[#allocation5 + $0x8] sm:$0xff]
    %v129 = vld [vmem:[#allocation5 + $0x10] sm:$0xff]
    %v130 = vld [vmem:[#allocation5 + $0x18] sm:$0xff]
    %v131 = vld [vmem:[#allocation5 + $0x20] sm:$0xff]
    %v132 = vld [vmem:[#allocation5 + $0x28] sm:$0xff]
    %v133 = vld [vmem:[#allocation5 + $0x30] sm:$0xff]
    %v134 = vld [vmem:[#allocation5 + $0x38] sm:$0xff]
    %v135 = vld [vmem:[#allocation5 + $0x40] sm:$0xff]
    %v136 = vld [vmem:[#allocation5 + $0x48] sm:$0xff]
    %v137 = vld [vmem:[#allocation5 + $0x50] sm:$0xff]
    %v138 = vld [vmem:[#allocation5 + $0x58] sm:$0xff]
    %v139 = vld [vmem:[#allocation5 + $0x60] sm:$0xff]
    %v140 = vld [vmem:[#allocation5 + $0x68] sm:$0xff]
    %v141 = vld [vmem:[#allocation5 + $0x70] sm:$0xff]
    %v142 = vld [vmem:[#allocation5 + $0x78] sm:$0xff]
    %v143 = vld [vmem:[#allocation5 + $0x80] sm:$0xff]
    %v144 = vld [vmem:[#allocation5 + $0x88] sm:$0xff]
    %v145 = vld [vmem:[#allocation5 + $0x90] sm:$0xff]
    %v146 = vld [vmem:[#allocation5 + $0x98] sm:$0xff]
    %v147 = vld [vmem:[#allocation5 + $0xa0] sm:$0xff]
    %v148 = vld [vmem:[#allocation5 + $0xa8] sm:$0xff]
    %v149 = vld [vmem:[#allocation5 + $0xb0] sm:$0xff]
    %v150 = vld [vmem:[#allocation5 + $0xb8] sm:$0xff]
    %v151 = vld [vmem:[#allocation5 + $0xc0] sm:$0xff]
    %v152 = vld [vmem:[#allocation5 + $0xc8] sm:$0xff]
    %v153 = vld [vmem:[#allocation5 + $0xd0] sm:$0xff]
    %v154 = vld [vmem:[#allocation5 + $0xd8] sm:$0xff]
    %v155 = vld [vmem:[#allocation5 + $0xe0] sm:$0xff]
    %v156 = vld [vmem:[#allocation5 + $0xe8] sm:$0xff]
    %v157 = vld [vmem:[#allocation5 + $0xf0] sm:$0xff]
    %v158 = vld [vmem:[#allocation5 + $0xf8] sm:$0xff]
    %v159 = vld [vmem:[#allocation5 + $0x100] sm:$0xff]
    %v160 = vld [vmem:[#allocation5 + $0x108] sm:$0xff]
    %v161 = vld [vmem:[#allocation5 + $0x110] sm:$0xff]
    %v162 = vld [vmem:[#allocation5 + $0x118] sm:$0xff]
    %v163 = vld [vmem:[#allocation5 + $0x120] sm:$0xff]
    %v164 = vld [vmem:[#allocation5 + $0x128] sm:$0xff]
    %v165 = vld [vmem:[#allocation5 + $0x130] sm:$0xff]
    %v166 = vld [vmem:[#allocation5 + $0x138] sm:$0xff]
    %v167 = vld [vmem:[#allocation5 + $0x140] sm:$0xff]
    %v168 = vld [vmem:[#allocation5 + $0x148] sm:$0xff]
    %v169 = vld [vmem:[#allocation5 + $0x150] sm:$0xff]
    %v170 = vld [vmem:[#allocation5 + $0x158] sm:$0xff]
    %v171 = vld [vmem:[#allocation5 + $0x160] sm:$0xff]
    %v172 = vld [vmem:[#allocation5 + $0x168] sm:$0xff]
    %v173 = vld [vmem:[#allocation5 + $0x170] sm:$0xff]
    %v174 = vld [vmem:[#allocation5 + $0x178] sm:$0xff]
    %v175 = vld [vmem:[#allocation5 + $0x180] sm:$0xff]
    %v176 = vld [vmem:[#allocation5 + $0x188] sm:$0xff]
    %v177 = vld [vmem:[#allocation5 + $0x190] sm:$0xff]
    %v178 = vld [vmem:[#allocation5 + $0x198] sm:$0xff]
    %v179 = vld [vmem:[#allocation5 + $0x1a0] sm:$0xff]
    %v180 = vld [vmem:[#allocation5 + $0x1a8] sm:$0xff]
    %v181 = vld [vmem:[#allocation5 + $0x1b0] sm:$0xff]
    %v182 = vld [vmem:[#allocation5 + $0x1b8] sm:$0xff]
    %v183 = vld [vmem:[#allocation5 + $0x1c0] sm:$0xff]
    %v184 = vld [vmem:[#allocation5 + $0x1c8] sm:$0xff]
    %v185 = vld [vmem:[#allocation5 + $0x1d0] sm:$0xff]
    %v186 = vld [vmem:[#allocation5 + $0x1d8] sm:$0xff]
    %v187 = vld [vmem:[#allocation5 + $0x1e0] sm:$0xff]
    %v188 = vld [vmem:[#allocation5 + $0x1e8] sm:$0xff]
    %v189 = vld [vmem:[#allocation5 + $0x1f0] sm:$0xff]
    %v190 = vld [vmem:[#allocation5 + $0x1f8] sm:$0xff]
    %v191 = vld [vmem:[#allocation7] sm:$0xf]
    %v193 = vperm.slane %v191, 0
    %v194 = vperm.slane %v191, 1
    %v195 = vperm.slane %v191, 2
    %v196 = vperm.slane %v191, 3
    %201 = vmatpush.msra.mxu0 %v187
    %202 = vmatpush.msra.mxu0 %v183
    %203 = vmatpush.msra.mxu0 %v179
    %204 = vmatpush.msra.mxu0 %v175
    %205 = vmatpush.msra.mxu0 %v171
    %206 = vmatpush.msra.mxu0 %v167
    %207 = vmatpush.msra.mxu0 %v163
    %208 = vmatpush.msra.mxu0 %v159
    %209 = vmatpush.msra.mxu0 %v155
    %210 = vmatpush.msra.mxu0 %v151
    %211 = vmatpush.msra.mxu0 %v147
    %212 = vmatpush.msra.mxu0 %v143
    %213 = vmatpush.msra.mxu0 %v139
    %214 = vmatpush.msra.mxu0 %v135
    %215 = vmatpush.msra.mxu0 %v131
    %216 = vmatpush.msra.mxu0 %v127
    %217 = vmatmul.f32.gmra.mxu0 %v125
    %v218 = vpop.f32.mrf.mxu0
    %v219 = vadd.f32 %v193, %v218
    %220 = vmatmul.f32.gmra.mxu0 %v126
    %v221 = vpop.f32.mrf.mxu0
    %v222 = vadd.f32 %v193, %v221
    %223 = vdwg.mxu0
    %224 = vmatpush.msra.mxu0 %v188
    %225 = vmatpush.msra.mxu0 %v184
    %226 = vmatpush.msra.mxu0 %v180
    %227 = vmatpush.msra.mxu0 %v176
    %228 = vmatpush.msra.mxu0 %v172
    %229 = vmatpush.msra.mxu0 %v168
    %230 = vmatpush.msra.mxu0 %v164
    %231 = vmatpush.msra.mxu0 %v160
    %232 = vmatpush.msra.mxu0 %v156
    %233 = vmatpush.msra.mxu0 %v152
    %234 = vmatpush.msra.mxu0 %v148
    %235 = vmatpush.msra.mxu0 %v144
    %236 = vmatpush.msra.mxu0 %v140
    %237 = vmatpush.msra.mxu0 %v136
    %238 = vmatpush.msra.mxu0 %v132
    %239 = vmatpush.msra.mxu0 %v128
    %240 = vmatmul.f32.gmra.mxu0 %v125
    %v241 = vpop.f32.mrf.mxu0
    %v242 = vadd.f32 %v194, %v241
    %243 = vmatmul.f32.gmra.mxu0 %v126
    %v244 = vpop.f32.mrf.mxu0
    %v245 = vadd.f32 %v194, %v244
    %246 = vdwg.mxu0
    %247 = vmatpush.msra.mxu0 %v189
    %248 = vmatpush.msra.mxu0 %v185
    %249 = vmatpush.msra.mxu0 %v181
    %250 = vmatpush.msra.mxu0 %v177
    %251 = vmatpush.msra.mxu0 %v173
    %252 = vmatpush.msra.mxu0 %v169
    %253 = vmatpush.msra.mxu0 %v165
    %254 = vmatpush.msra.mxu0 %v161
    %255 = vmatpush.msra.mxu0 %v157
    %256 = vmatpush.msra.mxu0 %v153
    %257 = vmatpush.msra.mxu0 %v149
    %258 = vmatpush.msra.mxu0 %v145
    %259 = vmatpush.msra.mxu0 %v141
    %260 = vmatpush.msra.mxu0 %v137
    %261 = vmatpush.msra.mxu0 %v133
    %262 = vmatpush.msra.mxu0 %v129
    %263 = vmatmul.f32.gmra.mxu0 %v125
    %v264 = vpop.f32.mrf.mxu0
    %v265 = vadd.f32 %v195, %v264
    %266 = vmatmul.f32.gmra.mxu0 %v126
    %v267 = vpop.f32.mrf.mxu0
    %v268 = vadd.f32 %v195, %v267
    %269 = vdwg.mxu0
    %270 = vmatpush.msra.mxu0 %v190
    %271 = vmatpush.msra.mxu0 %v186
    %272 = vmatpush.msra.mxu0 %v182
    %273 = vmatpush.msra.mxu0 %v178
    %274 = vmatpush.msra.mxu0 %v174
    %275 = vmatpush.msra.mxu0 %v170
    %276 = vmatpush.msra.mxu0 %v166
    %277 = vmatpush.msra.mxu0 %v162
    %278 = vmatpush.msra.mxu0 %v158
    %279 = vmatpush.msra.mxu0 %v154
    %280 = vmatpush.msra.mxu0 %v150
    %281 = vmatpush.msra.mxu0 %v146
    %282 = vmatpush.msra.mxu0 %v142
    %283 = vmatpush.msra.mxu0 %v138
    %284 = vmatpush.msra.mxu0 %v134
    %285 = vmatpush.msra.mxu0 %v130
    %286 = vmatmul.f32.gmra.mxu0 %v125
    %v287 = vpop.f32.mrf.mxu0
    %v288 = vadd.f32 %v196, %v287
    %289 = vmatmul.f32.gmra.mxu0 %v126
    %v290 = vpop.f32.mrf.mxu0
    %v291 = vadd.f32 %v196, %v290
    %292 = vdwg.mxu0
    %v293 = vmax.f32 %v219, 0.0
    %v294 = vmax.f32 %v242, 0.0
    %v295 = vmax.f32 %v265, 0.0
    %v296 = vmax.f32 %v288, 0.0
    %v297 = vmax.f32 %v222, 0.0
    %v298 = vmax.f32 %v245, 0.0
    %v299 = vmax.f32 %v268, 0.0
    %v300 = vmax.f32 %v291, 0.0
    %v301 = vld [vmem:[#allocation8] sm:$0xff]
    %v302 = vld [vmem:[#allocation8 + $0x8] sm:$0xff]
    %v303 = vld [vmem:[#allocation8 + $0x10] sm:$0xff]
    %v304 = vld [vmem:[#allocation8 + $0x18] sm:$0xff]
    %v305 = vld [vmem:[#allocation8 + $0x20] sm:$0xff]
    %v306 = vld [vmem:[#allocation8 + $0x28] sm:$0xff]
    %v307 = vld [vmem:[#allocation8 + $0x30] sm:$0xff]
    %v308 = vld [vmem:[#allocation8 + $0x38] sm:$0xff]
    %v309 = vld [vmem:[#allocation8 + $0x40] sm:$0xff]
    %v310 = vld [vmem:[#allocation8 + $0x48] sm:$0xff]
    %v311 = vld [vmem:[#allocation8 + $0x50] sm:$0xff]
    %v312 = vld [vmem:[#allocation8 + $0x58] sm:$0xff]
    %v313 = vld [vmem:[#allocation8 + $0x60] sm:$0xff]
    %v314 = vld [vmem:[#allocation8 + $0x68] sm:$0xff]
    %v315 = vld [vmem:[#allocation8 + $0x70] sm:$0xff]
    %v316 = vld [vmem:[#allocation8 + $0x78] sm:$0xff]
    %v317 = vld [vmem:[#allocation8 + $0x80] sm:$0xff]
    %v318 = vld [vmem:[#allocation8 + $0x88] sm:$0xff]
    %v319 = vld [vmem:[#allocation8 + $0x90] sm:$0xff]
    %v320 = vld [vmem:[#allocation8 + $0x98] sm:$0xff]
    %v321 = vld [vmem:[#allocation8 + $0xa0] sm:$0xff]
    %v322 = vld [vmem:[#allocation8 + $0xa8] sm:$0xff]
    %v323 = vld [vmem:[#allocation8 + $0xb0] sm:$0xff]
    %v324 = vld [vmem:[#allocation8 + $0xb8] sm:$0xff]
    %v325 = vld [vmem:[#allocation8 + $0xc0] sm:$0xff]
    %v326 = vld [vmem:[#allocation8 + $0xc8] sm:$0xff]
    %v327 = vld [vmem:[#allocation8 + $0xd0] sm:$0xff]
    %v328 = vld [vmem:[#allocation8 + $0xd8] sm:$0xff]
    %v329 = vld [vmem:[#allocation8 + $0xe0] sm:$0xff]
    %v330 = vld [vmem:[#allocation8 + $0xe8] sm:$0xff]
    %v331 = vld [vmem:[#allocation8 + $0xf0] sm:$0xff]
    %v332 = vld [vmem:[#allocation8 + $0xf8] sm:$0xff]
    %v333 = vld [vmem:[#allocation8 + $0x100] sm:$0xff]
    %v334 = vld [vmem:[#allocation8 + $0x108] sm:$0xff]
    %v335 = vld [vmem:[#allocation8 + $0x110] sm:$0xff]
    %v336 = vld [vmem:[#allocation8 + $0x118] sm:$0xff]
    %v337 = vld [vmem:[#allocation8 + $0x120] sm:$0xff]
    %v338 = vld [vmem:[#allocation8 + $0x128] sm:$0xff]
    %v339 = vld [vmem:[#allocation8 + $0x130] sm:$0xff]
    %v340 = vld [vmem:[#allocation8 + $0x138] sm:$0xff]
    %v341 = vld [vmem:[#allocation8 + $0x140] sm:$0xff]
    %v342 = vld [vmem:[#allocation8 + $0x148] sm:$0xff]
    %v343 = vld [vmem:[#allocation8 + $0x150] sm:$0xff]
    %v344 = vld [vmem:[#allocation8 + $0x158] sm:$0xff]
    %v345 = vld [vmem:[#allocation8 + $0x160] sm:$0xff]
    %v346 = vld [vmem:[#allocation8 + $0x168] sm:$0xff]
    %v347 = vld [vmem:[#allocation8 + $0x170] sm:$0xff]
    %v348 = vld [vmem:[#allocation8 + $0x178] sm:$0xff]
    %v349 = vld [vmem:[#allocation8 + $0x180] sm:$0xff]
    %v350 = vld [vmem:[#allocation8 + $0x188] sm:$0xff]
    %v351 = vld [vmem:[#allocation8 + $0x190] sm:$0xff]
    %v352 = vld [vmem:[#allocation8 + $0x198] sm:$0xff]
    %v353 = vld [vmem:[#allocation8 + $0x1a0] sm:$0xff]
    %v354 = vld [vmem:[#allocation8 + $0x1a8] sm:$0xff]
    %v355 = vld [vmem:[#allocation8 + $0x1b0] sm:$0xff]
    %v356 = vld [vmem:[#allocation8 + $0x1b8] sm:$0xff]
    %v357 = vld [vmem:[#allocation8 + $0x1c0] sm:$0xff]
    %v358 = vld [vmem:[#allocation8 + $0x1c8] sm:$0xff]
    %v359 = vld [vmem:[#allocation8 + $0x1d0] sm:$0xff]
    %v360 = vld [vmem:[#allocation8 + $0x1d8] sm:$0xff]
    %v361 = vld [vmem:[#allocation8 + $0x1e0] sm:$0xff]
    %v362 = vld [vmem:[#allocation8 + $0x1e8] sm:$0xff]
    %v363 = vld [vmem:[#allocation8 + $0x1f0] sm:$0xff]
    %v364 = vld [vmem:[#allocation8 + $0x1f8] sm:$0xff]
    %v365 = vld [vmem:[%s4] sm:$0x1]
    %v367 = vperm.slane %v365, 0
    %369 = vmatpush.msra.mxu0 %v316
    %370 = vmatpush.msra.mxu0 %v315
    %371 = vmatpush.msra.mxu0 %v314
    %372 = vmatpush.msra.mxu0 %v313
    %373 = vmatpush.msra.mxu0 %v312
    %374 = vmatpush.msra.mxu0 %v311
    %375 = vmatpush.msra.mxu0 %v310
    %376 = vmatpush.msra.mxu0 %v309
    %377 = vmatpush.msra.mxu0 %v308
    %378 = vmatpush.msra.mxu0 %v307
    %379 = vmatpush.msra.mxu0 %v306
    %380 = vmatpush.msra.mxu0 %v305
    %381 = vmatpush.msra.mxu0 %v304
    %382 = vmatpush.msra.mxu0 %v303
    %383 = vmatpush.msra.mxu0 %v302
    %384 = vmatpush.msra.mxu0 %v301
    %385 = vmatmul.f32.gmra.mxu0 %v293
    %v386 = vpop.f32.mrf.mxu0
    %v387 = vadd.f32 %v367, %v386
    %388 = vmatmul.f32.gmra.mxu0 %v297
    %v389 = vpop.f32.mrf.mxu0
    %v390 = vadd.f32 %v367, %v389
    %391 = vdwg.mxu0
    %392 = vmatpush.msra.mxu0 %v332
    %393 = vmatpush.msra.mxu0 %v331
    %394 = vmatpush.msra.mxu0 %v330
    %395 = vmatpush.msra.mxu0 %v329
    %396 = vmatpush.msra.mxu0 %v328
    %397 = vmatpush.msra.mxu0 %v327
    %398 = vmatpush.msra.mxu0 %v326
    %399 = vmatpush.msra.mxu0 %v325
    %400 = vmatpush.msra.mxu0 %v324
    %401 = vmatpush.msra.mxu0 %v323
    %402 = vmatpush.msra.mxu0 %v322
    %403 = vmatpush.msra.mxu0 %v321
    %404 = vmatpush.msra.mxu0 %v320
    %405 = vmatpush.msra.mxu0 %v319
    %406 = vmatpush.msra.mxu0 %v318
    %407 = vmatpush.msra.mxu0 %v317
    %408 = vmatmul.f32.gmra.mxu0 %v294
    %v409 = vpop.f32.mrf.mxu0
    %v410 = vadd.f32 %v387, %v409
    %411 = vmatmul.f32.gmra.mxu0 %v298
    %v412 = vpop.f32.mrf.mxu0
    %v413 = vadd.f32 %v390, %v412
    %414 = vdwg.mxu0
    %415 = vmatpush.msra.mxu0 %v348
    %416 = vmatpush.msra.mxu0 %v347
    %417 = vmatpush.msra.mxu0 %v346
    %418 = vmatpush.msra.mxu0 %v345
    %419 = vmatpush.msra.mxu0 %v344
    %420 = vmatpush.msra.mxu0 %v343
    %421 = vmatpush.msra.mxu0 %v342
    %422 = vmatpush.msra.mxu0 %v341
    %423 = vmatpush.msra.mxu0 %v340
    %424 = vmatpush.msra.mxu0 %v339
    %425 = vmatpush.msra.mxu0 %v338
    %426 = vmatpush.msra.mxu0 %v337
    %427 = vmatpush.msra.mxu0 %v336
    %428 = vmatpush.msra.mxu0 %v335
    %429 = vmatpush.msra.mxu0 %v334
    %430 = vmatpush.msra.mxu0 %v333
    %431 = vmatmul.f32.gmra.mxu0 %v295
    %v432 = vpop.f32.mrf.mxu0
    %v433 = vadd.f32 %v410, %v432
    %434 = vmatmul.f32.gmra.mxu0 %v299
    %v435 = vpop.f32.mrf.mxu0
    %v436 = vadd.f32 %v413, %v435
    %437 = vdwg.mxu0
    %438 = vmatpush.msra.mxu0 %v364
    %439 = vmatpush.msra.mxu0 %v363
    %440 = vmatpush.msra.mxu0 %v362
    %441 = vmatpush.msra.mxu0 %v361
    %442 = vmatpush.msra.mxu0 %v360
    %443 = vmatpush.msra.mxu0 %v359
    %444 = vmatpush.msra.mxu0 %v358
    %445 = vmatpush.msra.mxu0 %v357
    %446 = vmatpush.msra.mxu0 %v356
    %447 = vmatpush.msra.mxu0 %v355
    %448 = vmatpush.msra.mxu0 %v354
    %449 = vmatpush.msra.mxu0 %v353
    %450 = vmatpush.msra.mxu0 %v352
    %451 = vmatpush.msra.mxu0 %v351
    %452 = vmatpush.msra.mxu0 %v350
    %453 = vmatpush.msra.mxu0 %v349
    %454 = vmatmul.f32.gmra.mxu0 %v296
    %v455 = vpop.f32.mrf.mxu0
    %v456 = vadd.f32 %v433, %v455
    %457 = vmatmul.f32.gmra.mxu0 %v300
    %v458 = vpop.f32.mrf.mxu0
    %v459 = vadd.f32 %v436, %v458
    %460 = vdwg.mxu0
    %v461 = vmax.f32 %v456, 0.0
    %v462 = vmax.f32 %v459, 0.0
    %v463 = vld [vmem:[#allocation10] sm:$0xff]
    %v464 = vld [vmem:[#allocation10 + $0x8] sm:$0xff]
    %v465 = vld [vmem:[#allocation10 + $0x10] sm:$0xff]
    %v466 = vld [vmem:[#allocation10 + $0x18] sm:$0xff]
    %v467 = vld [vmem:[#allocation10 + $0x20] sm:$0xff]
    %v468 = vld [vmem:[#allocation10 + $0x28] sm:$0xff]
    %v469 = vld [vmem:[#allocation10 + $0x30] sm:$0xff]
    %v470 = vld [vmem:[#allocation10 + $0x38] sm:$0xff]
    %v471 = vld [vmem:[#allocation10 + $0x40] sm:$0xff]
    %v472 = vld [vmem:[#allocation10 + $0x48] sm:$0xff]
    %v473 = vld [vmem:[#allocation10 + $0x50] sm:$0xff]
    %v474 = vld [vmem:[#allocation10 + $0x58] sm:$0xff]
    %v475 = vld [vmem:[#allocation10 + $0x60] sm:$0xff]
    %v476 = vld [vmem:[#allocation10 + $0x68] sm:$0xff]
    %v477 = vld [vmem:[#allocation10 + $0x70] sm:$0xff]
    %v478 = vld [vmem:[#allocation10 + $0x78] sm:$0xff]
    %v479 = vld [vmem:[#allocation10 + $0x80] sm:$0xff]
    %v480 = vld [vmem:[#allocation10 + $0x88] sm:$0xff]
    %v481 = vld [vmem:[#allocation10 + $0x90] sm:$0xff]
    %v482 = vld [vmem:[#allocation10 + $0x98] sm:$0xff]
    %v483 = vld [vmem:[#allocation10 + $0xa0] sm:$0xff]
    %v484 = vld [vmem:[#allocation10 + $0xa8] sm:$0xff]
    %v485 = vld [vmem:[#allocation10 + $0xb0] sm:$0xff]
    %v486 = vld [vmem:[#allocation10 + $0xb8] sm:$0xff]
    %v487 = vld [vmem:[#allocation10 + $0xc0] sm:$0xff]
    %v488 = vld [vmem:[#allocation10 + $0xc8] sm:$0xff]
    %v489 = vld [vmem:[#allocation10 + $0xd0] sm:$0xff]
    %v490 = vld [vmem:[#allocation10 + $0xd8] sm:$0xff]
    %v491 = vld [vmem:[#allocation10 + $0xe0] sm:$0xff]
    %v492 = vld [vmem:[#allocation10 + $0xe8] sm:$0xff]
    %v493 = vld [vmem:[#allocation10 + $0xf0] sm:$0xff]
    %v494 = vld [vmem:[#allocation10 + $0xf8] sm:$0xff]
    %v495 = vld [vmem:[#allocation10 + $0x100] sm:$0xff]
    %v496 = vld [vmem:[#allocation10 + $0x108] sm:$0xff]
    %v497 = vld [vmem:[#allocation10 + $0x110] sm:$0xff]
    %v498 = vld [vmem:[#allocation10 + $0x118] sm:$0xff]
    %v499 = vld [vmem:[#allocation10 + $0x120] sm:$0xff]
    %v500 = vld [vmem:[#allocation10 + $0x128] sm:$0xff]
    %v501 = vld [vmem:[#allocation10 + $0x130] sm:$0xff]
    %v502 = vld [vmem:[#allocation10 + $0x138] sm:$0xff]
    %v503 = vld [vmem:[#allocation10 + $0x140] sm:$0xff]
    %v504 = vld [vmem:[#allocation10 + $0x148] sm:$0xff]
    %v505 = vld [vmem:[#allocation10 + $0x150] sm:$0xff]
    %v506 = vld [vmem:[#allocation10 + $0x158] sm:$0xff]
    %v507 = vld [vmem:[#allocation10 + $0x160] sm:$0xff]
    %v508 = vld [vmem:[#allocation10 + $0x168] sm:$0xff]
    %v509 = vld [vmem:[#allocation10 + $0x170] sm:$0xff]
    %v510 = vld [vmem:[#allocation10 + $0x178] sm:$0xff]
    %v511 = vld [vmem:[#allocation10 + $0x180] sm:$0xff]
    %v512 = vld [vmem:[#allocation10 + $0x188] sm:$0xff]
    %v513 = vld [vmem:[#allocation10 + $0x190] sm:$0xff]
    %v514 = vld [vmem:[#allocation10 + $0x198] sm:$0xff]
    %v515 = vld [vmem:[#allocation10 + $0x1a0] sm:$0xff]
    %v516 = vld [vmem:[#allocation10 + $0x1a8] sm:$0xff]
    %v517 = vld [vmem:[#allocation10 + $0x1b0] sm:$0xff]
    %v518 = vld [vmem:[#allocation10 + $0x1b8] sm:$0xff]
    %v519 = vld [vmem:[#allocation10 + $0x1c0] sm:$0xff]
    %v520 = vld [vmem:[#allocation10 + $0x1c8] sm:$0xff]
    %v521 = vld [vmem:[#allocation10 + $0x1d0] sm:$0xff]
    %v522 = vld [vmem:[#allocation10 + $0x1d8] sm:$0xff]
    %v523 = vld [vmem:[#allocation10 + $0x1e0] sm:$0xff]
    %v524 = vld [vmem:[#allocation10 + $0x1e8] sm:$0xff]
    %v525 = vld [vmem:[#allocation10 + $0x1f0] sm:$0xff]
    %v526 = vld [vmem:[#allocation10 + $0x1f8] sm:$0xff]
    %v527 = vld [vmem:[%s6] sm:$0xf]
    %v529 = vperm.slane %v527, 0
    %v530 = vperm.slane %v527, 1
    %v531 = vperm.slane %v527, 2
    %v532 = vperm.slane %v527, 3
    %537 = vmatpush.msra.mxu0 %v523
    %538 = vmatpush.msra.mxu0 %v519
    %539 = vmatpush.msra.mxu0 %v515
    %540 = vmatpush.msra.mxu0 %v511
    %541 = vmatpush.msra.mxu0 %v507
    %542 = vmatpush.msra.mxu0 %v503
    %543 = vmatpush.msra.mxu0 %v499
    %544 = vmatpush.msra.mxu0 %v495
    %545 = vmatpush.msra.mxu0 %v491
    %546 = vmatpush.msra.mxu0 %v487
    %547 = vmatpush.msra.mxu0 %v483
    %548 = vmatpush.msra.mxu0 %v479
    %549 = vmatpush.msra.mxu0 %v475
    %550 = vmatpush.msra.mxu0 %v471
    %551 = vmatpush.msra.mxu0 %v467
    %552 = vmatpush.msra.mxu0 %v463
    %553 = vmatmul.f32.gmra.mxu0 %v461
    %v554 = vpop.f32.mrf.mxu0
    %v555 = vadd.f32 %v529, %v554
    %556 = vmatmul.f32.gmra.mxu0 %v462
    %v557 = vpop.f32.mrf.mxu0
    %v558 = vadd.f32 %v529, %v557
    %559 = vdwg.mxu0
    %560 = vmatpush.msra.mxu0 %v524
    %561 = vmatpush.msra.mxu0 %v520
    %562 = vmatpush.msra.mxu0 %v516
    %563 = vmatpush.msra.mxu0 %v512
    %564 = vmatpush.msra.mxu0 %v508
    %565 = vmatpush.msra.mxu0 %v504
    %566 = vmatpush.msra.mxu0 %v500
    %567 = vmatpush.msra.mxu0 %v496
    %568 = vmatpush.msra.mxu0 %v492
    %569 = vmatpush.msra.mxu0 %v488
    %570 = vmatpush.msra.mxu0 %v484
    %571 = vmatpush.msra.mxu0 %v480
    %572 = vmatpush.msra.mxu0 %v476
    %573 = vmatpush.msra.mxu0 %v472
    %574 = vmatpush.msra.mxu0 %v468
    %575 = vmatpush.msra.mxu0 %v464
    %576 = vmatmul.f32.gmra.mxu0 %v461
    %v577 = vpop.f32.mrf.mxu0
    %v578 = vadd.f32 %v530, %v577
    %579 = vmatmul.f32.gmra.mxu0 %v462
    %v580 = vpop.f32.mrf.mxu0
    %v581 = vadd.f32 %v530, %v580
    %582 = vdwg.mxu0
    %583 = vmatpush.msra.mxu0 %v525
    %584 = vmatpush.msra.mxu0 %v521
    %585 = vmatpush.msra.mxu0 %v517
    %586 = vmatpush.msra.mxu0 %v513
    %587 = vmatpush.msra.mxu0 %v509
    %588 = vmatpush.msra.mxu0 %v505
    %589 = vmatpush.msra.mxu0 %v501
    %590 = vmatpush.msra.mxu0 %v497
    %591 = vmatpush.msra.mxu0 %v493
    %592 = vmatpush.msra.mxu0 %v489
    %593 = vmatpush.msra.mxu0 %v485
    %594 = vmatpush.msra.mxu0 %v481
    %595 = vmatpush.msra.mxu0 %v477
    %596 = vmatpush.msra.mxu0 %v473
    %597 = vmatpush.msra.mxu0 %v469
    %598 = vmatpush.msra.mxu0 %v465
    %599 = vmatmul.f32.gmra.mxu0 %v461
    %v600 = vpop.f32.mrf.mxu0
    %v601 = vadd.f32 %v531, %v600
    %602 = vmatmul.f32.gmra.mxu0 %v462
    %v603 = vpop.f32.mrf.mxu0
    %v604 = vadd.f32 %v531, %v603
    %605 = vdwg.mxu0
    %606 = vmatpush.msra.mxu0 %v526
    %607 = vmatpush.msra.mxu0 %v522
    %608 = vmatpush.msra.mxu0 %v518
    %609 = vmatpush.msra.mxu0 %v514
    %610 = vmatpush.msra.mxu0 %v510
    %611 = vmatpush.msra.mxu0 %v506
    %612 = vmatpush.msra.mxu0 %v502
    %613 = vmatpush.msra.mxu0 %v498
    %614 = vmatpush.msra.mxu0 %v494
    %615 = vmatpush.msra.mxu0 %v490
    %616 = vmatpush.msra.mxu0 %v486
    %617 = vmatpush.msra.mxu0 %v482
    %618 = vmatpush.msra.mxu0 %v478
    %619 = vmatpush.msra.mxu0 %v474
    %620 = vmatpush.msra.mxu0 %v470
    %621 = vmatpush.msra.mxu0 %v466
    %622 = vmatmul.f32.gmra.mxu0 %v461
    %v623 = vpop.f32.mrf.mxu0
    %v624 = vadd.f32 %v532, %v623
    %625 = vmatmul.f32.gmra.mxu0 %v462
    %v626 = vpop.f32.mrf.mxu0
    %v627 = vadd.f32 %v532, %v626
    %628 = vdwg.mxu0
    %v629 = vmax.f32 %v555, 0.0
    %v630 = vmax.f32 %v578, 0.0
    %v631 = vmax.f32 %v601, 0.0
    %v632 = vmax.f32 %v624, 0.0
    %v633 = vmax.f32 %v558, 0.0
    %v634 = vmax.f32 %v581, 0.0
    %v635 = vmax.f32 %v604, 0.0
    %v636 = vmax.f32 %v627, 0.0
    %v637 = vld [vmem:[#allocation11] sm:$0xff]
    %v638 = vld [vmem:[#allocation11 + $0x8] sm:$0xff]
    %v639 = vld [vmem:[#allocation11 + $0x10] sm:$0xff]
    %v640 = vld [vmem:[#allocation11 + $0x18] sm:$0xff]
    %v641 = vld [vmem:[#allocation11 + $0x20] sm:$0xff]
    %v642 = vld [vmem:[#allocation11 + $0x28] sm:$0xff]
    %v643 = vld [vmem:[#allocation11 + $0x30] sm:$0xff]
    %v644 = vld [vmem:[#allocation11 + $0x38] sm:$0xff]
    %v645 = vld [vmem:[#allocation11 + $0x40] sm:$0xff]
    %v646 = vld [vmem:[#allocation11 + $0x48] sm:$0xff]
    %v647 = vld [vmem:[#allocation11 + $0x50] sm:$0xff]
    %v648 = vld [vmem:[#allocation11 + $0x58] sm:$0xff]
    %v649 = vld [vmem:[#allocation11 + $0x60] sm:$0xff]
    %v650 = vld [vmem:[#allocation11 + $0x68] sm:$0xff]
    %v651 = vld [vmem:[#allocation11 + $0x70] sm:$0xff]
    %v652 = vld [vmem:[#allocation11 + $0x78] sm:$0xff]
    %v653 = vld [vmem:[#allocation11 + $0x80] sm:$0xff]
    %v654 = vld [vmem:[#allocation11 + $0x88] sm:$0xff]
    %v655 = vld [vmem:[#allocation11 + $0x90] sm:$0xff]
    %v656 = vld [vmem:[#allocation11 + $0x98] sm:$0xff]
    %v657 = vld [vmem:[#allocation11 + $0xa0] sm:$0xff]
    %v658 = vld [vmem:[#allocation11 + $0xa8] sm:$0xff]
    %v659 = vld [vmem:[#allocation11 + $0xb0] sm:$0xff]
    %v660 = vld [vmem:[#allocation11 + $0xb8] sm:$0xff]
    %v661 = vld [vmem:[#allocation11 + $0xc0] sm:$0xff]
    %v662 = vld [vmem:[#allocation11 + $0xc8] sm:$0xff]
    %v663 = vld [vmem:[#allocation11 + $0xd0] sm:$0xff]
    %v664 = vld [vmem:[#allocation11 + $0xd8] sm:$0xff]
    %v665 = vld [vmem:[#allocation11 + $0xe0] sm:$0xff]
    %v666 = vld [vmem:[#allocation11 + $0xe8] sm:$0xff]
    %v667 = vld [vmem:[#allocation11 + $0xf0] sm:$0xff]
    %v668 = vld [vmem:[#allocation11 + $0xf8] sm:$0xff]
    %v669 = vld [vmem:[#allocation11 + $0x100] sm:$0xff]
    %v670 = vld [vmem:[#allocation11 + $0x108] sm:$0xff]
    %v671 = vld [vmem:[#allocation11 + $0x110] sm:$0xff]
    %v672 = vld [vmem:[#allocation11 + $0x118] sm:$0xff]
    %v673 = vld [vmem:[#allocation11 + $0x120] sm:$0xff]
    %v674 = vld [vmem:[#allocation11 + $0x128] sm:$0xff]
    %v675 = vld [vmem:[#allocation11 + $0x130] sm:$0xff]
    %v676 = vld [vmem:[#allocation11 + $0x138] sm:$0xff]
    %v677 = vld [vmem:[#allocation11 + $0x140] sm:$0xff]
    %v678 = vld [vmem:[#allocation11 + $0x148] sm:$0xff]
    %v679 = vld [vmem:[#allocation11 + $0x150] sm:$0xff]
    %v680 = vld [vmem:[#allocation11 + $0x158] sm:$0xff]
    %v681 = vld [vmem:[#allocation11 + $0x160] sm:$0xff]
    %v682 = vld [vmem:[#allocation11 + $0x168] sm:$0xff]
    %v683 = vld [vmem:[#allocation11 + $0x170] sm:$0xff]
    %v684 = vld [vmem:[#allocation11 + $0x178] sm:$0xff]
    %v685 = vld [vmem:[#allocation11 + $0x180] sm:$0xff]
    %v686 = vld [vmem:[#allocation11 + $0x188] sm:$0xff]
    %v687 = vld [vmem:[#allocation11 + $0x190] sm:$0xff]
    %v688 = vld [vmem:[#allocation11 + $0x198] sm:$0xff]
    %v689 = vld [vmem:[#allocation11 + $0x1a0] sm:$0xff]
    %v690 = vld [vmem:[#allocation11 + $0x1a8] sm:$0xff]
    %v691 = vld [vmem:[#allocation11 + $0x1b0] sm:$0xff]
    %v692 = vld [vmem:[#allocation11 + $0x1b8] sm:$0xff]
    %v693 = vld [vmem:[#allocation11 + $0x1c0] sm:$0xff]
    %v694 = vld [vmem:[#allocation11 + $0x1c8] sm:$0xff]
    %v695 = vld [vmem:[#allocation11 + $0x1d0] sm:$0xff]
    %v696 = vld [vmem:[#allocation11 + $0x1d8] sm:$0xff]
    %v697 = vld [vmem:[#allocation11 + $0x1e0] sm:$0xff]
    %v698 = vld [vmem:[#allocation11 + $0x1e8] sm:$0xff]
    %v699 = vld [vmem:[#allocation11 + $0x1f0] sm:$0xff]
    %v700 = vld [vmem:[#allocation11 + $0x1f8] sm:$0xff]
    %v701 = vld [vmem:[%s8] sm:$0x1]
    %v703 = vperm.slane %v701, 0
    %705 = vmatpush.msra.mxu0 %v652
    %706 = vmatpush.msra.mxu0 %v651
    %707 = vmatpush.msra.mxu0 %v650
    %708 = vmatpush.msra.mxu0 %v649
    %709 = vmatpush.msra.mxu0 %v648
    %710 = vmatpush.msra.mxu0 %v647
    %711 = vmatpush.msra.mxu0 %v646
    %712 = vmatpush.msra.mxu0 %v645
    %713 = vmatpush.msra.mxu0 %v644
    %714 = vmatpush.msra.mxu0 %v643
    %715 = vmatpush.msra.mxu0 %v642
    %716 = vmatpush.msra.mxu0 %v641
    %717 = vmatpush.msra.mxu0 %v640
    %718 = vmatpush.msra.mxu0 %v639
    %719 = vmatpush.msra.mxu0 %v638
    %720 = vmatpush.msra.mxu0 %v637
    %721 = vmatmul.f32.gmra.mxu0 %v629
    %v722 = vpop.f32.mrf.mxu0
    %v723 = vadd.f32 %v703, %v722
    %724 = vmatmul.f32.gmra.mxu0 %v633
    %v725 = vpop.f32.mrf.mxu0
    %v726 = vadd.f32 %v703, %v725
    %727 = vdwg.mxu0
    %728 = vmatpush.msra.mxu0 %v668
    %729 = vmatpush.msra.mxu0 %v667
    %730 = vmatpush.msra.mxu0 %v666
    %731 = vmatpush.msra.mxu0 %v665
    %732 = vmatpush.msra.mxu0 %v664
    %733 = vmatpush.msra.mxu0 %v663
    %734 = vmatpush.msra.mxu0 %v662
    %735 = vmatpush.msra.mxu0 %v661
    %736 = vmatpush.msra.mxu0 %v660
    %737 = vmatpush.msra.mxu0 %v659
    %738 = vmatpush.msra.mxu0 %v658
    %739 = vmatpush.msra.mxu0 %v657
    %740 = vmatpush.msra.mxu0 %v656
    %741 = vmatpush.msra.mxu0 %v655
    %742 = vmatpush.msra.mxu0 %v654
    %743 = vmatpush.msra.mxu0 %v653
    %744 = vmatmul.f32.gmra.mxu0 %v630
    %v745 = vpop.f32.mrf.mxu0
    %v746 = vadd.f32 %v723, %v745
    %747 = vmatmul.f32.gmra.mxu0 %v634
    %v748 = vpop.f32.mrf.mxu0
    %v749 = vadd.f32 %v726, %v748
    %750 = vdwg.mxu0
    %751 = vmatpush.msra.mxu0 %v684
    %752 = vmatpush.msra.mxu0 %v683
    %753 = vmatpush.msra.mxu0 %v682
    %754 = vmatpush.msra.mxu0 %v681
    %755 = vmatpush.msra.mxu0 %v680
    %756 = vmatpush.msra.mxu0 %v679
    %757 = vmatpush.msra.mxu0 %v678
    %758 = vmatpush.msra.mxu0 %v677
    %759 = vmatpush.msra.mxu0 %v676
    %760 = vmatpush.msra.mxu0 %v675
    %761 = vmatpush.msra.mxu0 %v674
    %762 = vmatpush.msra.mxu0 %v673
    %763 = vmatpush.msra.mxu0 %v672
    %764 = vmatpush.msra.mxu0 %v671
    %765 = vmatpush.msra.mxu0 %v670
    %766 = vmatpush.msra.mxu0 %v669
    %767 = vmatmul.f32.gmra.mxu0 %v631
    %v768 = vpop.f32.mrf.mxu0
    %v769 = vadd.f32 %v746, %v768
    %770 = vmatmul.f32.gmra.mxu0 %v635
    %v771 = vpop.f32.mrf.mxu0
    %v772 = vadd.f32 %v749, %v771
    %773 = vdwg.mxu0
    %774 = vmatpush.msra.mxu0 %v700
    %775 = vmatpush.msra.mxu0 %v699
    %776 = vmatpush.msra.mxu0 %v698
    %777 = vmatpush.msra.mxu0 %v697
    %778 = vmatpush.msra.mxu0 %v696
    %779 = vmatpush.msra.mxu0 %v695
    %780 = vmatpush.msra.mxu0 %v694
    %781 = vmatpush.msra.mxu0 %v693
    %782 = vmatpush.msra.mxu0 %v692
    %783 = vmatpush.msra.mxu0 %v691
    %784 = vmatpush.msra.mxu0 %v690
    %785 = vmatpush.msra.mxu0 %v689
    %786 = vmatpush.msra.mxu0 %v688
    %787 = vmatpush.msra.mxu0 %v687
    %788 = vmatpush.msra.mxu0 %v686
    %789 = vmatpush.msra.mxu0 %v685
    %790 = vmatmul.f32.gmra.mxu0 %v632
    %v791 = vpop.f32.mrf.mxu0
    %v792 = vadd.f32 %v769, %v791
    %793 = vmatmul.f32.gmra.mxu0 %v636
    %v794 = vpop.f32.mrf.mxu0
    %v795 = vadd.f32 %v772, %v794
    %796 = vdwg.mxu0
    %797 = vst [vmem:[#allocation13] sm:$0xff] %v792
    %798 = vst [vmem:[#allocation13 + $0x8] sm:$0xff] %v795
    // Predicated region
    $region62: #{tpu_custom_call.1} parent=1 // pred_check
      _
    $region63: #{tpu_custom_call.1} parent=1 // pred_check_branch
      %800 = sbr.rel (0) target = $region65
    $region64: #{tpu_custom_call.1} parent=1 // pred_region
      %802 = vsyncadd [#allocation4], 0
      %s803 = sshll.u32 [#allocation13], 4
      %s804 = int_to_ptr.vmem [resolvable:$true] %s803
      %s805 = sshll.u32 %s9, 4
      %s806 = int_to_ptr.hbm [resolvable:$true] %s805
      %811 = dma.vmem_to_hbm [thread:$0]  %s804, 256, %s806, [#allocation4], 128, 128, 8
    $region65: #{tpu_custom_call.1} parent=1 // pred_fallthru
      _
    // Predicated region
    $region66: #{tpu_custom_call.1} parent=1 // pred_check
      _
    $region67: #{tpu_custom_call.1} parent=1 // pred_check_branch
      %813 = sbr.rel (0) target = $region69
    $region68: #{tpu_custom_call.1} parent=1 // pred_region
      %815 = dma.done [#allocation4], 256
    $region69: #{tpu_custom_call.1} parent=1 // pred_fallthru
      _
    %816 = vsyncpa [#allocation3], 1
    %817 = vsyncpa [#allocation6], 1
    %818 = vsyncpa [#allocation9], 1
    %819 = vsyncpa [#allocation12], 1
    %820 = vsyncpa [#allocation4], 1

</llo_original>
